<compile_context>
chip_gen: v6e
topology: v6e:2x2x1
jax: 0.10.0
libtpu: 0.0.40
codegen_flags: <defaults>
</compile_context>

<pallas_src>
import jax
import jax.numpy as jnp
from jax.experimental import pallas as pl
from jax.experimental.pallas import tpu as pltpu


def _mlp_kernel(x_ref, w1_ref, b1_ref, w2_ref, b2_ref, w3_ref, b3_ref, o_ref):
    # Feature-major: x_ref is (3, TB); weights are (out, in); biases (out, 1).
    x = x_ref[...]                                                      # (3,  TB)
    h1 = jnp.dot(w1_ref[...], x, preferred_element_type=jnp.float32)   # (20, TB)
    h1 = jnp.maximum(h1 + b1_ref[...], 0.0)                            # ReLU (VPU, lane-dense)
    h2 = jnp.dot(w2_ref[...], h1, preferred_element_type=jnp.float32)  # (40, TB)
    h2 = jnp.maximum(h2 + b2_ref[...], 0.0)                            # ReLU
    h3 = jnp.dot(w3_ref[...], h2, preferred_element_type=jnp.float32)  # (3,  TB)
    o_ref[...] = (h3 + b3_ref[...]).astype(o_ref.dtype)                # lane-dense store


def net_modified_forward(x, params, max_tile=8192):
    """x: (B, 3) float32 (PyTorch layout).  Returns (B, 3) float32.

    params: w1 (20,3), b1 (20,1), w2 (40,20), b2 (40,1), w3 (3,40), b3 (3,1).
    """
    w1, b1 = params["w1"], params["b1"]
    w2, b2 = params["w2"], params["b2"]
    w3, b3 = params["w3"], params["b3"]

    B = x.shape[0]

    # Flip to feature-major so batch lands on the 128-lane axis.  Under jit,
    # allow_input_fusion lets XLA fuse this into the pallas operand read.
    xt = jnp.asarray(x, jnp.float32).T                                  # (3, B)

    # Pad only to the next 128-lane multiple (NOT to a tb multiple); the last
    # grid step may be a partial block (padded reads / masked writes).
    padded_b = ((B + 127) // 128) * 128
    if padded_b != B:
        xt = jnp.pad(xt, ((0, 0), (0, padded_b - B)))

    if padded_b <= max_tile:
        tb = padded_b                       # single grid step for small batches
        steps = 1
    else:
        steps = pl.cdiv(padded_b, max_tile)
        if steps % 2:                       # v7x: even step count -> both TCs busy
            steps += 1
        tb = ((pl.cdiv(padded_b, steps) + 127) // 128) * 128
        steps = pl.cdiv(padded_b, tb)
    grid = (steps,)

    # Streamed activation tiles; weights/biases stay VMEM-resident (constant map).
    x_spec = pl.BlockSpec((3, tb), lambda i: (0, i))
    o_spec = pl.BlockSpec((3, tb), lambda i: (0, i))
    resident = lambda a: pl.BlockSpec(a.shape, lambda i: (0,) * a.ndim)

    param_bytes = 4 * (w1.size + b1.size + w2.size + b2.size + w3.size + b3.size)
    cost = pl.CostEstimate(
        flops=2 * padded_b * (3 * 20 + 20 * 40 + 40 * 3),
        transcendentals=0,
        bytes_accessed=4 * (3 * padded_b) * 2 + param_bytes,
    )

    out_t = pl.pallas_call(
        _mlp_kernel,
        out_shape=jax.ShapeDtypeStruct((3, padded_b), jnp.float32),
        grid=grid,
        in_specs=[x_spec, resident(w1), resident(b1), resident(w2),
                  resident(b2), resident(w3), resident(b3)],
        out_specs=o_spec,
        compiler_params=pltpu.CompilerParams(
            dimension_semantics=("parallel",),   # v7x: shard batch across 2 TCs
            # Let XLA fuse the wrapper transpose into the x operand read only.
            allow_input_fusion=[True, False, False, False, False, False, False],
        ),
        cost_estimate=cost,
    )(xt, w1, b1, w2, b2, w3, b3)

    return out_t[:, :B].T                                               # (B, 3)


def init_params(key):
    """Deterministic init mirroring torch.nn.Linear.
    fc1: Linear(3, 20), fc2: Linear(20, 40), fc3: Linear(40, 3).
    Weights stored as (out_features, in_features); biases as (out_features, 1)."""
    def linear_init(k, fan_in, fan_out):
        kw, kb = jax.random.split(k)
        bound = 1.0 / jnp.sqrt(float(fan_in))
        w = jax.random.uniform(kw, (fan_out, fan_in), jnp.float32, -bound, bound)
        b = jax.random.uniform(kb, (fan_out, 1), jnp.float32, -bound, bound)
        return w, b

    k1, k2, k3 = jax.random.split(key, 3)
    w1, b1 = linear_init(k1, 3, 20)
    w2, b2 = linear_init(k2, 20, 40)
    w3, b3 = linear_init(k3, 40, 3)
    return {"w1": w1, "b1": b1, "w2": w2, "b2": b2, "w3": w3, "b3": b3}


def _reference_forward(x, params):
    h1 = jnp.maximum(x @ params["w1"].T + params["b1"].T, 0.0)
    h2 = jnp.maximum(h1 @ params["w2"].T + params["b2"].T, 0.0)
    return h2 @ params["w3"].T + params["b3"].T


if __name__ == "__main__":
    key = jax.random.PRNGKey(0)
    k_params, k_x1, k_x2, k_x3 = jax.random.split(key, 4)

    params = init_params(k_params)
    fwd = jax.jit(net_modified_forward)   # jit so the transpose can fuse into the call

    # Small batch (module-consistent shape): pads to one 128-lane tile.
    x_small = jax.random.normal(k_x1, (8, 3), dtype=jnp.float32)
    out_small = jax.block_until_ready(fwd(x_small, params))
    ref_small = _reference_forward(x_small, params)
    assert out_small.shape == (8, 3)
    assert jnp.allclose(out_small, ref_small, atol=1e-5, rtol=1e-5)

    # Odd batch: exercises pad-to-128 + tail slicing.
    x_odd = jax.random.normal(k_x3, (300, 3), dtype=jnp.float32)
    out_odd = jax.block_until_ready(fwd(x_odd, params))
    assert out_odd.shape == (300, 3)
    assert jnp.allclose(out_odd, _reference_forward(x_odd, params), atol=1e-5, rtol=1e-5)

    # Larger batch: single wide lane-dense tile with VMEM-resident weights.
    x_big = jax.random.normal(k_x2, (2048, 3), dtype=jnp.float32)
    out_big = jax.block_until_ready(fwd(x_big, params))
    ref_big = _reference_forward(x_big, params)
    assert out_big.shape == (2048, 3)
    assert jnp.allclose(out_big, ref_big, atol=1e-4, rtol=1e-4)

    print("KERNEL_OK")
</pallas_src>

<mosaic_0001>
module attributes {stable_mosaic.version = 11 : i64} {
  func.func @_mlp_kernel(%arg0: i32, %arg1: memref<3x128xf32, #tpu.memory_space<vmem>>, %arg2: memref<20x3xf32, #tpu.memory_space<vmem>>, %arg3: memref<20x1xf32, #tpu.memory_space<vmem>>, %arg4: memref<40x20xf32, #tpu.memory_space<vmem>>, %arg5: memref<40x1xf32, #tpu.memory_space<vmem>>, %arg6: memref<3x40xf32, #tpu.memory_space<vmem>>, %arg7: memref<3x1xf32, #tpu.memory_space<vmem>>, %arg8: memref<3x128xf32, #tpu.memory_space<vmem>>) attributes {dimension_semantics = [#tpu.dimension_semantics<parallel>], iteration_bounds = array<i64: 1>, scalar_prefetch = 0 : i64, scratch_operands = 0 : i64, tpu.core_type = #tpu.core_type<tc>, window_params = [{transform_indices = @transform_0, window_bounds = array<i64: 3, 128>}, {pipeline_mode = #tpu.pipeline_mode<synchronous>, transform_indices = @transform_1, window_bounds = array<i64: 20, 3>}, {pipeline_mode = #tpu.pipeline_mode<synchronous>, transform_indices = @transform_2, window_bounds = array<i64: 20, 1>}, {pipeline_mode = #tpu.pipeline_mode<synchronous>, transform_indices = @transform_3, window_bounds = array<i64: 40, 20>}, {pipeline_mode = #tpu.pipeline_mode<synchronous>, transform_indices = @transform_4, window_bounds = array<i64: 40, 1>}, {pipeline_mode = #tpu.pipeline_mode<synchronous>, transform_indices = @transform_5, window_bounds = array<i64: 3, 40>}, {pipeline_mode = #tpu.pipeline_mode<synchronous>, transform_indices = @transform_6, window_bounds = array<i64: 3, 1>}, {transform_indices = @transform_7, window_bounds = array<i64: 3, 128>}]} {
    %c0 = arith.constant 0 : index
    %c0_0 = arith.constant 0 : index
    %0 = vector.load %arg1[%c0, %c0_0] : memref<3x128xf32, #tpu.memory_space<vmem>>, vector<3x128xf32>
    %c0_1 = arith.constant 0 : index
    %c0_2 = arith.constant 0 : index
    %1 = vector.load %arg2[%c0_1, %c0_2] : memref<20x3xf32, #tpu.memory_space<vmem>>, vector<20x3xf32>
    %cst = arith.constant dense<0.000000e+00> : vector<20x128xf32>
    %2 = tpu.matmul %1, %0, %cst {dimension_numbers = #tpu.dot_dimension_numbers<[1], [0], [0], [1], [0, 0, 1, 1], [], []>} : vector<20x3xf32>, vector<3x128xf32>, vector<20x128xf32> -> vector<20x128xf32>
    %c0_3 = arith.constant 0 : index
    %c0_4 = arith.constant 0 : index
    %3 = vector.load %arg3[%c0_3, %c0_4] : memref<20x1xf32, #tpu.memory_space<vmem>>, vector<20x1xf32>
    %4 = vector.broadcast %3 : vector<20x1xf32> to vector<20x128xf32>
    %5 = arith.addf %2, %4 : vector<20x128xf32>
    %cst_5 = arith.constant 0.000000e+00 : f32
    %6 = vector.broadcast %cst_5 : f32 to vector<20x128xf32>
    %7 = arith.maximumf %5, %6 : vector<20x128xf32>
    %c0_6 = arith.constant 0 : index
    %c0_7 = arith.constant 0 : index
    %8 = vector.load %arg4[%c0_6, %c0_7] : memref<40x20xf32, #tpu.memory_space<vmem>>, vector<40x20xf32>
    %cst_8 = arith.constant dense<0.000000e+00> : vector<40x128xf32>
    %9 = tpu.matmul %8, %7, %cst_8 {dimension_numbers = #tpu.dot_dimension_numbers<[1], [0], [0], [1], [0, 0, 1, 1], [], []>} : vector<40x20xf32>, vector<20x128xf32>, vector<40x128xf32> -> vector<40x128xf32>
    %c0_9 = arith.constant 0 : index
    %c0_10 = arith.constant 0 : index
    %10 = vector.load %arg5[%c0_9, %c0_10] : memref<40x1xf32, #tpu.memory_space<vmem>>, vector<40x1xf32>
    %11 = vector.broadcast %10 : vector<40x1xf32> to vector<40x128xf32>
    %12 = arith.addf %9, %11 : vector<40x128xf32>
    %cst_11 = arith.constant 0.000000e+00 : f32
    %13 = vector.broadcast %cst_11 : f32 to vector<40x128xf32>
    %14 = arith.maximumf %12, %13 : vector<40x128xf32>
    %c0_12 = arith.constant 0 : index
    %c0_13 = arith.constant 0 : index
    %15 = vector.load %arg6[%c0_12, %c0_13] : memref<3x40xf32, #tpu.memory_space<vmem>>, vector<3x40xf32>
    %cst_14 = arith.constant dense<0.000000e+00> : vector<3x128xf32>
    %16 = tpu.matmul %15, %14, %cst_14 {dimension_numbers = #tpu.dot_dimension_numbers<[1], [0], [0], [1], [0, 0, 1, 1], [], []>} : vector<3x40xf32>, vector<40x128xf32>, vector<3x128xf32> -> vector<3x128xf32>
    %c0_15 = arith.constant 0 : index
    %c0_16 = arith.constant 0 : index
    %17 = vector.load %arg7[%c0_15, %c0_16] : memref<3x1xf32, #tpu.memory_space<vmem>>, vector<3x1xf32>
    %18 = vector.broadcast %17 : vector<3x1xf32> to vector<3x128xf32>
    %19 = arith.addf %16, %18 : vector<3x128xf32>
    %c0_17 = arith.constant 0 : index
    %c0_18 = arith.constant 0 : index
    %20 = vector.load %arg8[%c0_17, %c0_18] : memref<3x128xf32, #tpu.memory_space<vmem>>, vector<3x128xf32>
    tpu.vector_store %arg8[%c0_17, %c0_18], %19 {strides = array<i32>} : memref<3x128xf32, #tpu.memory_space<vmem>>, vector<3x128xf32>,
    return
  }
  func.func @transform_0(%arg0: i32) -> (i32, i32) {
    %c0_i32 = arith.constant 0 : i32
    %c0_i32_0 = arith.constant 0 : i32
    return %c0_i32, %arg0 : i32, i32
  }
  func.func @transform_1(%arg0: i32) -> (i32, i32) {
    %c0_i32 = arith.constant 0 : i32
    %c0_i32_0 = arith.constant 0 : i32
    %c0_i32_1 = arith.constant 0 : i32
    return %c0_i32, %c0_i32_0 : i32, i32
  }
  func.func @transform_2(%arg0: i32) -> (i32, i32) {
    %c0_i32 = arith.constant 0 : i32
    %c0_i32_0 = arith.constant 0 : i32
    %c0_i32_1 = arith.constant 0 : i32
    return %c0_i32, %c0_i32_0 : i32, i32
  }
  func.func @transform_3(%arg0: i32) -> (i32, i32) {
    %c0_i32 = arith.constant 0 : i32
    %c0_i32_0 = arith.constant 0 : i32
    %c0_i32_1 = arith.constant 0 : i32
    return %c0_i32, %c0_i32_0 : i32, i32
  }
  func.func @transform_4(%arg0: i32) -> (i32, i32) {
    %c0_i32 = arith.constant 0 : i32
    %c0_i32_0 = arith.constant 0 : i32
    %c0_i32_1 = arith.constant 0 : i32
    return %c0_i32, %c0_i32_0 : i32, i32
  }
  func.func @transform_5(%arg0: i32) -> (i32, i32) {
    %c0_i32 = arith.constant 0 : i32
    %c0_i32_0 = arith.constant 0 : i32
    %c0_i32_1 = arith.constant 0 : i32
    return %c0_i32, %c0_i32_0 : i32, i32
  }
  func.func @transform_6(%arg0: i32) -> (i32, i32) {
    %c0_i32 = arith.constant 0 : i32
    %c0_i32_0 = arith.constant 0 : i32
    %c0_i32_1 = arith.constant 0 : i32
    return %c0_i32, %c0_i32_0 : i32, i32
  }
  func.func @transform_7(%arg0: i32) -> (i32, i32) {
    %c0_i32 = arith.constant 0 : i32
    %c0_i32_0 = arith.constant 0 : i32
    return %c0_i32, %arg0 : i32, i32
  }
}

</mosaic_0001>

<llo_original>
// kernel: net_modified_forward.2
$region0: #{net_modified_forward.2}
  #allocation0 [shape = 'u32[]', space=smem, size = 0x4, offset = 0x4, fixed_abs, tag = 'smem constant byte address 0x4 - core index']
  #allocation1 [shape = 'u32[144,128]{1,0:T(1,128)}', space=vmem, size = 0x12000, scoped, tag = 'internal scratch']
  #allocation2 [shape = 'u32[2048]{0}', space=vmem, size = 0x2000, scoped, tag = 'scoped memory for net_modified_forward.2']
  #allocation3 [shape = 'u32[2048]{0}', space=vmem, size = 0x2000, scoped, tag = 'scoped memory for net_modified_forward.2']
  #allocation4 [shape = 'u32[2048]{0}', space=vmem, size = 0x2000, scoped, tag = 'scoped memory for net_modified_forward.2']
  #allocation5 [shape = 'u32[2048]{0}', space=vmem, size = 0x2000, scoped, tag = 'scoped memory for net_modified_forward.2']
  #allocation6 [shape = 'u32[2048]{0}', space=vmem, size = 0x2000, scoped, tag = 'scoped memory for net_modified_forward.2']
  %s0 = inlined_call_operand.vmem [shape: f32[20,3], index: 0, kind: input, shape index: {}]
  %s1 = inlined_call_operand.vmem [shape: f32[20,1], index: 1, kind: input, shape index: {}]
  %s2 = inlined_call_operand.vmem [shape: f32[40,20], index: 2, kind: input, shape index: {}]
  %s3 = inlined_call_operand.vmem [shape: f32[40,1], index: 3, kind: input, shape index: {}]
  %s4 = inlined_call_operand.vmem [shape: f32[3,40], index: 4, kind: input, shape index: {}]
  %s5 = inlined_call_operand.vmem [shape: f32[3,1], index: 5, kind: input, shape index: {}]
  %s6 = inlined_call_operand.vmem [shape: f32[3,8], index: 6, kind: input, shape index: {}]
  %s7 = inlined_call_operand.<no memory space> [shape: f32[], index: 7, kind: input, shape index: {}]
  %s8 = inlined_call_operand.vmem [shape: f32[3,128], index: 8, kind: output, shape index: {}]
  %s9 = sld [smem:[#allocation0]]
  $region38: #{net_modified_forward.2} parent=0
    _
  %s11 = ssub.s32 1, %s9
  %s12 = scalar_select 0, %s11, %s9
  %v13 = vstv %s7
  $region1: #{net_modified_forward.2} parent=0
    #allocation7 [shape = 'u8[2048]{0}', space=vmem, size = 0x800, dematerialized = true, scoped, tag = 'FusionAdapter Buffer %fusion.1 = f32[3,128]{1,0:T(4,128)} fusion(%param_6.1, %param_7), kind=kLoop, calls=%fused_computation.1.clone, metadata={op_name="jit(net_modified_forward)/jit(_pad)/pad" stack_frame_id=8}']
    // Predicated region
    $region2: #{net_modified_forward.2} parent=1 // pred_check
      _
    $region3: #{net_modified_forward.2} parent=1 // pred_check_branch
      %15 = sbr.rel (0) target = $region5
    $region4: #{net_modified_forward.2} parent=1 // pred_region
      _
    $region5: #{net_modified_forward.2} parent=1 // pred_fallthru
      _
    // Predicated region
    $region6: #{net_modified_forward.2} parent=1 // pred_check
      _
    $region7: #{net_modified_forward.2} parent=1 // pred_check_branch
      %17 = sbr.rel (0) target = $region9
    $region8: #{net_modified_forward.2} parent=1 // pred_region
      _
    $region9: #{net_modified_forward.2} parent=1 // pred_fallthru
      _
    // Predicated region
    $region10: #{net_modified_forward.2} parent=1 // pred_check
      _
    $region11: #{net_modified_forward.2} parent=1 // pred_check_branch
      %19 = sbr.rel (0) target = $region13
    $region12: #{net_modified_forward.2} parent=1 // pred_region
      _
    $region13: #{net_modified_forward.2} parent=1 // pred_fallthru
      _
    // Predicated region
    $region14: #{net_modified_forward.2} parent=1 // pred_check
      _
    $region15: #{net_modified_forward.2} parent=1 // pred_check_branch
      %21 = sbr.rel (0) target = $region17
    $region16: #{net_modified_forward.2} parent=1 // pred_region
      _
    $region17: #{net_modified_forward.2} parent=1 // pred_fallthru
      _
    // Predicated region
    $region18: #{net_modified_forward.2} parent=1 // pred_check
      _
    $region19: #{net_modified_forward.2} parent=1 // pred_check_branch
      %23 = sbr.rel (0) target = $region21
    $region20: #{net_modified_forward.2} parent=1 // pred_region
      _
    $region21: #{net_modified_forward.2} parent=1 // pred_fallthru
      _
    // Predicated region
    $region22: #{net_modified_forward.2} parent=1 // pred_check
      _
    $region23: #{net_modified_forward.2} parent=1 // pred_check_branch
      %25 = sbr.rel (0) target = $region25
    $region24: #{net_modified_forward.2} parent=1 // pred_region
      _
    $region25: #{net_modified_forward.2} parent=1 // pred_fallthru
      _
    // Predicated region
    $region26: #{net_modified_forward.2} parent=1 // pred_check
      _
    $region27: #{net_modified_forward.2} parent=1 // pred_check_branch
      %27 = sbr.rel (0) target = $region29
    $region28: #{net_modified_forward.2} parent=1 // pred_region
      _
    $region29: #{net_modified_forward.2} parent=1 // pred_fallthru
      _
    %v28 = vld [vmem:[%s6] sm:$0x7]
    %v29 = vlaneseq
    %v30 = vshrl.u32 %v29, 7
    %vm32 = vcmp.lt.s32.totalorder %v30, 3
    %v33 = vsel %vm32, %v28, %v13
    %v34 = vlaneseq
    %v35 = vand.u32 %v34, 127
    %vm37 = vcmp.lt.s32.totalorder %v35, 8
    %v38 = vsel %vm37, %v33, %v13
    %s40 = ssub.s32 16, 1
    %41 = vst [vmem:[#allocation7] sm:%s40] %v38
    %v42 = vld [vmem:[#allocation7] sm:$0x7]
    %v43 = vld [vmem:[%s0] sm:$0xff]
    %v44 = vld [vmem:[%s0 + $0x8] sm:$0xff]
    %v45 = vld [vmem:[%s0 + $0x10] sm:$0xf]
    %v46 = vld [vmem:[%s1] sm:$0xff]
    %v47 = vld [vmem:[%s1 + $0x8] sm:$0xff]
    %v48 = vld [vmem:[%s1 + $0x10] sm:$0xf]
    %50 = vset.pattern.permute.xlu0 0
    %51 = vperm.xlu0 %50, %v46
    %v52 = vpop.permute.xlu0 %51
    %55 = vset.pattern.permute.xlu0 0
    %56 = vperm.xlu0 %55, %v47
    %v57 = vpop.permute.xlu0 %56
    %60 = vset.pattern.permute.xlu0 0
    %61 = vperm.xlu0 %60, %v48
    %v62 = vpop.permute.xlu0 %61
    %vm64 = vcmask 23552
    %v66 = vsel %vm64, %v43, 0
    %v69 = vsel %vm64, %v44, 0
    %v72 = vsel %vm64, %v45, 0
    %vm74 = vcmask 1042432
    %v76 = vsel %vm74, %v42, 0
    %78 = vmatprep.subr.mxu0 0.0
    %79 = vmatpush1.msra.mxu0 0.0
    %80 = vmatprep.subr.mxu0 0.0
    %81 = vmatpush1.msra.mxu0 0.0
    %82 = vmatprep.subr.mxu0 0.0
    %83 = vmatpush1.msra.mxu0 0.0
    %84 = vmatprep.subr.mxu0 0.0
    %85 = vmatpush1.msra.mxu0 0.0
    %86 = vmatprep.subr.mxu0 0.0
    %87 = vmatpush1.msra.mxu0 0.0
    %88 = vmatprep.subr.mxu0 0.0
    %89 = vmatpush1.msra.mxu0 0.0
    %90 = vmatprep.subr.mxu0 0.0
    %91 = vmatpush1.msra.mxu0 0.0
    %92 = vmatprep.subr.mxu0 0.0
    %93 = vmatpush1.msra.mxu0 0.0
    %94 = vmatprep.subr.mxu0 0.0
    %95 = vmatpush1.msra.mxu0 0.0
    %96 = vmatprep.subr.mxu0 0.0
    %97 = vmatpush1.msra.mxu0 0.0
    %98 = vmatprep.subr.mxu0 0.0
    %99 = vmatpush1.msra.mxu0 0.0
    %100 = vmatprep.subr.mxu0 0.0
    %101 = vmatpush1.msra.mxu0 0.0
    %102 = vmatprep.subr.mxu0 0.0
    %103 = vmatpush1.msra.mxu0 0.0
    %104 = vmatprep.subr.mxu0 0.0
    %105 = vmatpush1.msra.mxu0 0.0
    %106 = vmatprep.subr.mxu0 0.0
    %107 = vmatpush1.msra.mxu0 0.0
    %108 = vmatprep.subr.mxu0 0.0
    %109 = vmatpush1.msra.mxu0 %v76
    %110 = vmatprep.subr.mxu0 0.0
    %111 = vmatpush2.msra.mxu0 0.0
    %112 = vmatprep.subr.mxu0 0.0
    %113 = vmatpush2.msra.mxu0 0.0
    %114 = vmatprep.subr.mxu0 0.0
    %115 = vmatpush2.msra.mxu0 0.0
    %116 = vmatprep.subr.mxu0 0.0
    %117 = vmatpush2.msra.mxu0 0.0
    %118 = vmatprep.subr.mxu0 0.0
    %119 = vmatpush2.msra.mxu0 0.0
    %120 = vmatprep.subr.mxu0 0.0
    %121 = vmatpush2.msra.mxu0 0.0
    %122 = vmatprep.subr.mxu0 0.0
    %123 = vmatpush2.msra.mxu0 0.0
    %124 = vmatprep.subr.mxu0 0.0
    %125 = vmatpush2.msra.mxu0 0.0
    %126 = vmatprep.subr.mxu0 0.0
    %127 = vmatpush2.msra.mxu0 0.0
    %128 = vmatprep.subr.mxu0 0.0
    %129 = vmatpush2.msra.mxu0 0.0
    %130 = vmatprep.subr.mxu0 0.0
    %131 = vmatpush2.msra.mxu0 0.0
    %132 = vmatprep.subr.mxu0 0.0
    %133 = vmatpush2.msra.mxu0 0.0
    %134 = vmatprep.subr.mxu0 0.0
    %135 = vmatpush2.msra.mxu0 0.0
    %136 = vmatprep.subr.mxu0 0.0
    %137 = vmatpush2.msra.mxu0 0.0
    %138 = vmatprep.subr.mxu0 0.0
    %139 = vmatpush2.msra.mxu0 0.0
    %140 = vmatprep.subr.mxu0 0.0
    %141 = vmatpush2.msra.mxu0 0.0
    %142 = vmatprep.mubr.f32.mxu0 0.0
    %143 = vmatmul.mubr.f32.gmra.mxu0 %v66
    %v144 = vpop.f32.mrf.mxu0
    %v145 = vadd.f32 %v52, %v144
    %v146 = vpop.f32.mrf.mxu0
    %147 = vmatprep.mubr.f32.mxu0 0.0
    %148 = vmatmul.mubr.f32.gmra.mxu0 %v69
    %v149 = vpop.f32.mrf.mxu0
    %v150 = vadd.f32 %v57, %v149
    %v151 = vpop.f32.mrf.mxu0
    %152 = vmatprep.mubr.f32.mxu0 0.0
    %153 = vmatmul.mubr.f32.gmra.mxu0 %v72
    %v154 = vpop.f32.mrf.mxu0
    %v155 = vadd.f32 %v62, %v154
    %v156 = vpop.f32.mrf.mxu0
    %157 = vdwg.mxu0
    %v158 = vmax.f32 %v145, 0.0
    %v159 = vmax.f32 %v150, 0.0
    %v160 = vmax.f32 %v155, 0.0
    %v161 = vld [vmem:[%s2] sm:$0xff]
    %v162 = vld [vmem:[%s2 + $0x8] sm:$0xff]
    %v163 = vld [vmem:[%s2 + $0x10] sm:$0xff]
    %v164 = vld [vmem:[%s2 + $0x18] sm:$0xff]
    %v165 = vld [vmem:[%s2 + $0x20] sm:$0xff]
    %v166 = vld [vmem:[%s3] sm:$0xff]
    %v167 = vld [vmem:[%s3 + $0x8] sm:$0xff]
    %v168 = vld [vmem:[%s3 + $0x10] sm:$0xff]
    %v169 = vld [vmem:[%s3 + $0x18] sm:$0xff]
    %v170 = vld [vmem:[%s3 + $0x20] sm:$0xff]
    %172 = vset.pattern.permute.xlu0 0
    %173 = vperm.xlu0 %172, %v166
    %v174 = vpop.permute.xlu0 %173
    %177 = vset.pattern.permute.xlu0 0
    %178 = vperm.xlu0 %177, %v167
    %v179 = vpop.permute.xlu0 %178
    %182 = vset.pattern.permute.xlu0 0
    %183 = vperm.xlu0 %182, %v168
    %v184 = vpop.permute.xlu0 %183
    %187 = vset.pattern.permute.xlu0 0
    %188 = vperm.xlu0 %187, %v169
    %v189 = vpop.permute.xlu0 %188
    %192 = vset.pattern.permute.xlu0 0
    %193 = vperm.xlu0 %192, %v170
    %v194 = vpop.permute.xlu0 %193
    %vm196 = vcmask 162816
    %v198 = vsel %vm196, %v161, 0
    %v201 = vsel %vm196, %v162, 0
    %v204 = vsel %vm196, %v163, 0
    %v207 = vsel %vm196, %v164, 0
    %v210 = vsel %vm196, %v165, 0
    %vm212 = vcmask 1043456
    %v214 = vsel %vm212, %v160, 0
    %216 = vmatprep.subr.mxu0 0.0
    %217 = vmatpush1.msra.mxu0 0.0
    %218 = vmatprep.subr.mxu0 0.0
    %219 = vmatpush1.msra.mxu0 0.0
    %220 = vmatprep.subr.mxu0 0.0
    %221 = vmatpush1.msra.mxu0 0.0
    %222 = vmatprep.subr.mxu0 0.0
    %223 = vmatpush1.msra.mxu0 0.0
    %224 = vmatprep.subr.mxu0 0.0
    %225 = vmatpush1.msra.mxu0 0.0
    %226 = vmatprep.subr.mxu0 0.0
    %227 = vmatpush1.msra.mxu0 0.0
    %228 = vmatprep.subr.mxu0 0.0
    %229 = vmatpush1.msra.mxu0 0.0
    %230 = vmatprep.subr.mxu0 0.0
    %231 = vmatpush1.msra.mxu0 0.0
    %232 = vmatprep.subr.mxu0 0.0
    %233 = vmatpush1.msra.mxu0 0.0
    %234 = vmatprep.subr.mxu0 0.0
    %235 = vmatpush1.msra.mxu0 0.0
    %236 = vmatprep.subr.mxu0 0.0
    %237 = vmatpush1.msra.mxu0 0.0
    %238 = vmatprep.subr.mxu0 0.0
    %239 = vmatpush1.msra.mxu0 0.0
    %240 = vmatprep.subr.mxu0 0.0
    %241 = vmatpush1.msra.mxu0 0.0
    %242 = vmatprep.subr.mxu0 0.0
    %243 = vmatpush1.msra.mxu0 %v214
    %244 = vmatprep.subr.mxu0 0.0
    %245 = vmatpush1.msra.mxu0 %v159
    %246 = vmatprep.subr.mxu0 0.0
    %247 = vmatpush1.msra.mxu0 %v158
    %248 = vmatprep.subr.mxu0 0.0
    %249 = vmatpush2.msra.mxu0 0.0
    %250 = vmatprep.subr.mxu0 0.0
    %251 = vmatpush2.msra.mxu0 0.0
    %252 = vmatprep.subr.mxu0 0.0
    %253 = vmatpush2.msra.mxu0 0.0
    %254 = vmatprep.subr.mxu0 0.0
    %255 = vmatpush2.msra.mxu0 0.0
    %256 = vmatprep.subr.mxu0 0.0
    %257 = vmatpush2.msra.mxu0 0.0
    %258 = vmatprep.subr.mxu0 0.0
    %259 = vmatpush2.msra.mxu0 0.0
    %260 = vmatprep.subr.mxu0 0.0
    %261 = vmatpush2.msra.mxu0 0.0
    %262 = vmatprep.subr.mxu0 0.0
    %263 = vmatpush2.msra.mxu0 0.0
    %264 = vmatprep.subr.mxu0 0.0
    %265 = vmatpush2.msra.mxu0 0.0
    %266 = vmatprep.subr.mxu0 0.0
    %267 = vmatpush2.msra.mxu0 0.0
    %268 = vmatprep.subr.mxu0 0.0
    %269 = vmatpush2.msra.mxu0 0.0
    %270 = vmatprep.subr.mxu0 0.0
    %271 = vmatpush2.msra.mxu0 0.0
    %272 = vmatprep.subr.mxu0 0.0
    %273 = vmatpush2.msra.mxu0 0.0
    %274 = vmatprep.subr.mxu0 0.0
    %275 = vmatpush2.msra.mxu0 0.0
    %276 = vmatprep.subr.mxu0 0.0
    %277 = vmatpush2.msra.mxu0 0.0
    %278 = vmatprep.subr.mxu0 0.0
    %279 = vmatpush2.msra.mxu0 0.0
    %280 = vmatprep.mubr.f32.mxu0 0.0
    %281 = vmatmul.mubr.f32.gmra.mxu0 %v198
    %v282 = vpop.f32.mrf.mxu0
    %v283 = vadd.f32 %v174, %v282
    %v284 = vpop.f32.mrf.mxu0
    %285 = vmatprep.mubr.f32.mxu0 0.0
    %286 = vmatmul.mubr.f32.gmra.mxu0 %v201
    %v287 = vpop.f32.mrf.mxu0
    %v288 = vadd.f32 %v179, %v287
    %v289 = vpop.f32.mrf.mxu0
    %290 = vmatprep.mubr.f32.mxu0 0.0
    %291 = vmatmul.mubr.f32.gmra.mxu0 %v204
    %v292 = vpop.f32.mrf.mxu0
    %v293 = vadd.f32 %v184, %v292
    %v294 = vpop.f32.mrf.mxu0
    %295 = vmatprep.mubr.f32.mxu0 0.0
    %296 = vmatmul.mubr.f32.gmra.mxu0 %v207
    %v297 = vpop.f32.mrf.mxu0
    %v298 = vadd.f32 %v189, %v297
    %v299 = vpop.f32.mrf.mxu0
    %300 = vmatprep.mubr.f32.mxu0 0.0
    %301 = vmatmul.mubr.f32.gmra.mxu0 %v210
    %v302 = vpop.f32.mrf.mxu0
    %v303 = vadd.f32 %v194, %v302
    %v304 = vpop.f32.mrf.mxu0
    %305 = vdwg.mxu0
    %v306 = vmax.f32 %v283, 0.0
    %v307 = vmax.f32 %v288, 0.0
    %v308 = vmax.f32 %v293, 0.0
    %v309 = vmax.f32 %v298, 0.0
    %v310 = vmax.f32 %v303, 0.0
    %v311 = vld [vmem:[%s4] sm:$0x7]
    %v312 = vld [vmem:[%s5] sm:$0x7]
    %314 = vset.pattern.permute.xlu0 0
    %315 = vperm.xlu0 %314, %v312
    %v316 = vpop.permute.xlu0 %315
    %vm318 = vcmask 326656
    %v320 = vsel %vm318, %v311, 0
    %322 = vmatprep.subr.mxu0 0.0
    %323 = vmatpush1.msra.mxu0 0.0
    %324 = vmatprep.subr.mxu0 0.0
    %325 = vmatpush1.msra.mxu0 0.0
    %326 = vmatprep.subr.mxu0 0.0
    %327 = vmatpush1.msra.mxu0 0.0
    %328 = vmatprep.subr.mxu0 0.0
    %329 = vmatpush1.msra.mxu0 0.0
    %330 = vmatprep.subr.mxu0 0.0
    %331 = vmatpush1.msra.mxu0 0.0
    %332 = vmatprep.subr.mxu0 0.0
    %333 = vmatpush1.msra.mxu0 0.0
    %334 = vmatprep.subr.mxu0 0.0
    %335 = vmatpush1.msra.mxu0 0.0
    %336 = vmatprep.subr.mxu0 0.0
    %337 = vmatpush1.msra.mxu0 0.0
    %338 = vmatprep.subr.mxu0 0.0
    %339 = vmatpush1.msra.mxu0 0.0
    %340 = vmatprep.subr.mxu0 0.0
    %341 = vmatpush1.msra.mxu0 0.0
    %342 = vmatprep.subr.mxu0 0.0
    %343 = vmatpush1.msra.mxu0 0.0
    %344 = vmatprep.subr.mxu0 0.0
    %345 = vmatpush1.msra.mxu0 %v310
    %346 = vmatprep.subr.mxu0 0.0
    %347 = vmatpush1.msra.mxu0 %v309
    %348 = vmatprep.subr.mxu0 0.0
    %349 = vmatpush1.msra.mxu0 %v308
    %350 = vmatprep.subr.mxu0 0.0
    %351 = vmatpush1.msra.mxu0 %v307
    %352 = vmatprep.subr.mxu0 0.0
    %353 = vmatpush1.msra.mxu0 %v306
    %354 = vmatprep.subr.mxu0 0.0
    %355 = vmatpush2.msra.mxu0 0.0
    %356 = vmatprep.subr.mxu0 0.0
    %357 = vmatpush2.msra.mxu0 0.0
    %358 = vmatprep.subr.mxu0 0.0
    %359 = vmatpush2.msra.mxu0 0.0
    %360 = vmatprep.subr.mxu0 0.0
    %361 = vmatpush2.msra.mxu0 0.0
    %362 = vmatprep.subr.mxu0 0.0
    %363 = vmatpush2.msra.mxu0 0.0
    %364 = vmatprep.subr.mxu0 0.0
    %365 = vmatpush2.msra.mxu0 0.0
    %366 = vmatprep.subr.mxu0 0.0
    %367 = vmatpush2.msra.mxu0 0.0
    %368 = vmatprep.subr.mxu0 0.0
    %369 = vmatpush2.msra.mxu0 0.0
    %370 = vmatprep.subr.mxu0 0.0
    %371 = vmatpush2.msra.mxu0 0.0
    %372 = vmatprep.subr.mxu0 0.0
    %373 = vmatpush2.msra.mxu0 0.0
    %374 = vmatprep.subr.mxu0 0.0
    %375 = vmatpush2.msra.mxu0 0.0
    %376 = vmatprep.subr.mxu0 0.0
    %377 = vmatpush2.msra.mxu0 0.0
    %378 = vmatprep.subr.mxu0 0.0
    %379 = vmatpush2.msra.mxu0 0.0
    %380 = vmatprep.subr.mxu0 0.0
    %381 = vmatpush2.msra.mxu0 0.0
    %382 = vmatprep.subr.mxu0 0.0
    %383 = vmatpush2.msra.mxu0 0.0
    %384 = vmatprep.subr.mxu0 0.0
    %385 = vmatpush2.msra.mxu0 0.0
    %386 = vmatprep.mubr.f32.mxu0 0.0
    %387 = vmatmul.mubr.f32.gmra.mxu0 %v320
    %v388 = vpop.f32.mrf.mxu0
    %v389 = vadd.f32 %v316, %v388
    %v390 = vpop.f32.mrf.mxu0
    %391 = vdwg.mxu0
    %392 = vst [vmem:[%s8] sm:$0x7] %v389
    // Predicated region
    $region30: #{net_modified_forward.2} parent=1 // pred_check
      _
    $region31: #{net_modified_forward.2} parent=1 // pred_check_branch
      %394 = sbr.rel (0) target = $region33
    $region32: #{net_modified_forward.2} parent=1 // pred_region
      _
    $region33: #{net_modified_forward.2} parent=1 // pred_fallthru
      _
    // Predicated region
    $region34: #{net_modified_forward.2} parent=1 // pred_check
      _
    $region35: #{net_modified_forward.2} parent=1 // pred_check_branch
      %396 = sbr.rel (0) target = $region37
    $region36: #{net_modified_forward.2} parent=1 // pred_region
      _
    $region37: #{net_modified_forward.2} parent=1 // pred_fallthru
      _

</llo_original>
